<compile_context>
chip_gen: v7x
topology: tpu7x:2x2x1
jax: 0.10.0
libtpu: 0.0.40
codegen_flags: <defaults>
</compile_context>

<pallas_src>
import functools

import jax
import jax.numpy as jnp
import numpy as np
from jax.experimental import pallas as pl
from jax.experimental.pallas import tpu as pltpu


# ---------------------------------------------------------------------------
# Fused kernel: conv1 + ReLU + conv2 + ReLU + 2x2 max-pool.
# Everything is 2-D (rows, lanes); one grid step = images_per_step images.
# ---------------------------------------------------------------------------
def _encoder_block_kernel(x1e_ref, x1o_ref, a1_ref, a2_ref, b1_ref, b2_ref,
                          o_ref, *, ho):
    # x1e_ref / x1o_ref : (M, 3*W*Cin)   K-stacked conv1 LHS rows, even / odd
    #                     output-row parity (M = images_per_step * Ho)
    # a1_ref            : (3*W*Cin, W*Cout)     K-stacked conv1 banded weight
    # a2_ref            : (3*W*Cout, 2*Wo*Cout) K-stacked conv2 banded weight,
    #                     [even output cols | odd output cols] along N
    # b1_ref            : (1, W*Cout)    conv1 bias row (tiled over width)
    # b2_ref            : (1, 2*Wo*Cout) conv2 bias row (tiled, both halves)
    # o_ref             : (M, Wo*Cout)   pooled output rows
    f32 = jnp.float32
    M = o_ref.shape[0]
    Lp = o_ref.shape[1]          # Wo * Cout
    L1 = a1_ref.shape[1]         # W * Cout
    cdt = a2_ref.dtype           # MXU operand dtype (f32 or bf16)

    def mm(a, b):
        return jnp.dot(a, b, preferred_element_type=f32)

    # ---- conv1 + ReLU: one K-stacked GEMM per row parity --------------------
    b1 = b1_ref[...]
    a1 = a1_ref[...]
    y_e = jnp.maximum(mm(x1e_ref[...], a1) + b1, 0.0)   # conv1 rows r = 2p
    y_o = jnp.maximum(mm(x1o_ref[...], a1) + b1, 0.0)   # conv1 rows r = 2p+1

    # ---- conv2 vertical halo rows, in-register (no scratch round-trip) ------
    # conv2 row 2p   needs conv1 rows 2p-1, 2p,   2p+1 -> (y_o shifted down), y_e, y_o
    # conv2 row 2p+1 needs conv1 rows 2p,   2p+1, 2p+2 -> y_e, y_o, (y_e shifted up)
    # Zero the rows that fall outside each image (per-image SAME padding).
    rows = jax.lax.broadcasted_iota(jnp.int32, (M, L1), 0)
    y_o_prev = jnp.where((rows % ho) == 0, 0.0, pltpu.roll(y_o, 1, 0))
    y_e_next = jnp.where((rows % ho) == ho - 1, 0.0, pltpu.roll(y_e, M - 1, 0))

    y_e_c = y_e.astype(cdt)
    y_o_c = y_o.astype(cdt)
    lhs_e = jnp.concatenate([y_o_prev.astype(cdt), y_e_c, y_o_c], axis=-1)
    lhs_o = jnp.concatenate([y_e_c, y_o_c, y_e_next.astype(cdt)], axis=-1)

    # ---- conv2 (+bias): even & odd output columns side by side in N ---------
    a2 = a2_ref[...]
    b2 = b2_ref[...]
    cc_e = mm(lhs_e, a2) + b2    # conv2 rows 2p   : [even cols | odd cols]
    cc_o = mm(lhs_o, a2) + b2    # conv2 rows 2p+1 : [even cols | odd cols]

    # ---- 2x2 max-pool epilogue (ReLU commutes with max) ---------------------
    m_rows = jnp.maximum(cc_e, cc_o)                       # max over row pair
    pooled = jnp.maximum(m_rows[:, :Lp], m_rows[:, Lp:])   # max over col pair
    o_ref[...] = jnp.maximum(pooled, 0.0).astype(o_ref.dtype)


# ---------------------------------------------------------------------------
# Host-side construction of the banded GEMM operands (tiny, init-time only).
# Horizontal SAME padding is folded in: out-of-range taps are dropped.
# ---------------------------------------------------------------------------
def _conv1_band_operands(w1, b1, W, dtype):
    """A1s: (3*W*Cin, W*Cout);  A1s[kh*W*Cin + wi*Cin + ci, c*Cout + co] =
    w1[co, ci, kh, kw] where wi = c + kw - 1 (skipped if outside [0, W))."""
    w = np.asarray(w1, np.float32)                 # (Cout, Cin, 3, 3)
    Cout, Cin = w.shape[0], w.shape[1]
    Lin, L1 = W * Cin, W * Cout
    a = np.zeros((3, Lin, L1), np.float32)
    for kh in range(3):
        for kw in range(3):
            blk = w[:, :, kh, kw].T                # (Cin, Cout)
            for c in range(W):
                wi = c + kw - 1
                if 0 <= wi < W:
                    a[kh, wi * Cin:(wi + 1) * Cin, c * Cout:(c + 1) * Cout] = blk
    brow = np.tile(np.asarray(b1, np.float32), W)[None, :]
    return jnp.asarray(a.reshape(3 * Lin, L1), dtype), jnp.asarray(brow, jnp.float32)


def _conv2_pool_band_operands(w2, b2, W, dtype):
    """A2s: (3*W*Cmid, 2*Wo*Cout); columns [0,Lp) produce the even output
    columns (c = 2q) of each pooling pair, columns [Lp,2Lp) the odd ones."""
    w = np.asarray(w2, np.float32)                 # (Cout, Cmid, 3, 3)
    Cout, Cmid = w.shape[0], w.shape[1]
    Wo = W // 2
    L1, Lp = W * Cmid, Wo * Cout
    a = np.zeros((3, L1, 2 * Lp), np.float32)
    for kh in range(3):
        for kw in range(3):
            blk = w[:, :, kh, kw].T                # (Cmid, Cout)
            for q in range(Wo):
                wie = 2 * q + kw - 1               # input col for output col 2q
                wio = 2 * q + kw                   # input col for output col 2q+1
                if 0 <= wie < W:
                    a[kh, wie * Cmid:(wie + 1) * Cmid, q * Cout:(q + 1) * Cout] = blk
                if 0 <= wio < W:
                    a[kh, wio * Cmid:(wio + 1) * Cmid,
                      Lp + q * Cout:Lp + (q + 1) * Cout] = blk
    brow = np.tile(np.asarray(b2, np.float32), 2 * Wo)[None, :]
    return jnp.asarray(a.reshape(3 * L1, 2 * Lp), dtype), jnp.asarray(brow, jnp.float32)


def _pick_images_per_step(n_imgs, ho):
    """Largest divisor of n_imgs with <=256 GEMM rows per step, keeping the
    grid >= 2 steps (v7x dual-TensorCore) when the batch allows it."""
    best = 1
    for b in range(1, n_imgs + 1):
        if n_imgs % b:
            continue
        if b * ho > 256:
            break
        if n_imgs > 1 and n_imgs // b < 2:
            continue
        if (b * ho) % 8 == 0 or b == n_imgs:
            best = b
    if (best * ho) % 8 != 0 and best != n_imgs:
        best = n_imgs                      # full-extent block is always legal
    return best


# ---------------------------------------------------------------------------
# Forward pass wrapper.
# ---------------------------------------------------------------------------
def encoder_block_forward(x_nchw, w1, b1, w2, b2, *,
                          compute_dtype=jnp.float32, images_per_step=None):
    N, Cin, H, W = x_nchw.shape
    Cout = w1.shape[0]
    assert H % 2 == 0 and W % 2 == 0, "MaxPool2d(2,2) path assumes even H, W"
    Ho, Wo = H // 2, W // 2
    Lin = W * Cin                # lane width of input rows
    L1 = W * Cout                # lane width of conv1 activation rows
    Lp = Wo * Cout               # lane width of pooled output rows
    K1, K2 = 3 * Lin, 3 * L1     # K-stacked GEMM depths

    # Explicit guard: banded weights scale O(W^2 * C^2); width-tiling (or the
    # plain 9x shifted-slab GEMM) is required before this hits v7x's 64 MiB
    # VMEM.  Not needed at these sizes.
    band_bytes = (K1 * L1 + K2 * 2 * Lp) * jnp.dtype(compute_dtype).itemsize
    if band_bytes > 16 * 1024 * 1024:
        raise NotImplementedError(
            "banded conv weights (%d MiB) too large for a single VMEM tile; "
            "width-tile the kernel for this size" % (band_bytes >> 20))

    a1s, b1row = _conv1_band_operands(w1, b1, W, compute_dtype)
    a2s, b2row = _conv2_pool_band_operands(w2, b2, W, compute_dtype)

    # NCHW -> lane-dense (rows, W*Cin); SAME padding is vertical-only (the
    # horizontal pad is folded into the banded weights).
    x = jnp.transpose(x_nchw, (0, 2, 3, 1)).reshape(N, H, Lin)
    xp = jnp.pad(x, ((0, 0), (1, 1), (0, 0))).astype(compute_dtype)

    # K-stacked conv1 LHS rows: the three vertical taps concatenated along
    # lanes, split by output-row parity so the 2x2 pool needs no strided reads.
    #   even rows r=2p   -> padded rows 2p, 2p+1, 2p+2
    #   odd  rows r=2p+1 -> padded rows 2p+1, 2p+2, 2p+3
    x1e = jnp.concatenate(
        [xp[:, 0:H:2], xp[:, 1:H + 1:2], xp[:, 2:H + 2:2]], axis=-1)
    x1o = jnp.concatenate(
        [xp[:, 1:H + 1:2], xp[:, 2:H + 2:2], xp[:, 3:H + 2:2]], axis=-1)
    x1e = x1e.reshape(N * Ho, K1)
    x1o = x1o.reshape(N * Ho, K1)

    B = images_per_step if images_per_step is not None else _pick_images_per_step(N, Ho)
    assert N % B == 0
    Mstep = B * Ho

    out = pl.pallas_call(
        functools.partial(_encoder_block_kernel, ho=Ho),
        out_shape=jax.ShapeDtypeStruct((N * Ho, Lp), x_nchw.dtype),
        grid_spec=pltpu.PrefetchScalarGridSpec(
            num_scalar_prefetch=0,
            grid=(N // B,),
            in_specs=[
                pl.BlockSpec((Mstep, K1), lambda i: (i, 0)),      # x1e rows
                pl.BlockSpec((Mstep, K1), lambda i: (i, 0)),      # x1o rows
                pl.BlockSpec((K1, L1), lambda i: (0, 0)),         # conv1 weight
                pl.BlockSpec((K2, 2 * Lp), lambda i: (0, 0)),     # conv2 weight
                pl.BlockSpec((1, L1), lambda i: (0, 0)),          # bias1 row
                pl.BlockSpec((1, 2 * Lp), lambda i: (0, 0)),      # bias2 row
            ],
            out_specs=pl.BlockSpec((Mstep, Lp), lambda i: (i, 0)),
        ),
        compiler_params=pltpu.CompilerParams(
            dimension_semantics=("parallel",)),
    )(x1e, x1o, a1s, a2s, b1row, b2row)

    # (N*Ho, Wo*Cout) -> NCHW (the reshape is free; only the final transpose
    # touches HBM, required by the module's NCHW interface).
    return jnp.transpose(out.reshape(N, Ho, Wo, Cout), (0, 3, 1, 2))


class EncoderBlockPallas:
    """Pallas equivalent of the PyTorch EncoderBlock(in_, out_)."""

    def __init__(self, in_, out_, key, compute_dtype=jnp.float32):
        k1, k2, k3, k4 = jax.random.split(key, 4)
        self.w1 = jax.random.normal(k1, (out_, in_, 3, 3), jnp.float32) / np.sqrt(9 * in_)
        self.b1 = jax.random.normal(k2, (out_,), jnp.float32) * 0.01
        self.w2 = jax.random.normal(k3, (out_, out_, 3, 3), jnp.float32) / np.sqrt(9 * out_)
        self.b2 = jax.random.normal(k4, (out_,), jnp.float32) * 0.01
        # jnp.bfloat16 recommended on v6e / v7x (f32 kept here for the 1e-4 check).
        self.compute_dtype = compute_dtype

    def __call__(self, x_nchw):
        return encoder_block_forward(x_nchw, self.w1, self.b1, self.w2, self.b2,
                                     compute_dtype=self.compute_dtype)


# ---------------------------------------------------------------------------
# Pure-JAX reference (for the correctness check)
# ---------------------------------------------------------------------------
def _reference(x, w1, b1, w2, b2):
    def conv_relu(x, w, b):
        y = jax.lax.conv_general_dilated(
            x, w, window_strides=(1, 1), padding="SAME",
            dimension_numbers=("NCHW", "OIHW", "NCHW"))
        return jax.nn.relu(y + b[None, :, None, None])

    y = conv_relu(x, w1, b1)
    y = conv_relu(y, w2, b2)
    return jax.lax.reduce_window(y, -jnp.inf, jax.lax.max,
                                 (1, 1, 2, 2), (1, 1, 2, 2), "VALID")


if __name__ == "__main__":
    key = jax.random.PRNGKey(0)
    kx, kp = jax.random.split(key)

    N, Cin, Cout, H, W = 2, 4, 8, 16, 16
    x = jax.random.normal(kx, (N, Cin, H, W), jnp.float32)

    block = EncoderBlockPallas(Cin, Cout, kp)
    fwd = jax.jit(block.__call__)
    y = jax.block_until_ready(fwd(x))

    assert y.shape == (N, Cout, H // 2, W // 2), y.shape

    y_ref = _reference(x, block.w1, block.b1, block.w2, block.b2)
    np.testing.assert_allclose(np.asarray(y), np.asarray(y_ref),
                               rtol=1e-4, atol=1e-4)

    print("KERNEL_OK")
</pallas_src>

<mosaic_0001>
module attributes {stable_mosaic.version = 11 : i64} {
  func.func @_encoder_block_kernel(%arg0: i32, %arg1: memref<8x192xf32, #tpu.memory_space<vmem>>, %arg2: memref<8x192xf32, #tpu.memory_space<vmem>>, %arg3: memref<192x128xf32, #tpu.memory_space<vmem>>, %arg4: memref<384x128xf32, #tpu.memory_space<vmem>>, %arg5: memref<1x128xf32, #tpu.memory_space<vmem>>, %arg6: memref<1x128xf32, #tpu.memory_space<vmem>>, %arg7: memref<8x64xf32, #tpu.memory_space<vmem>>) attributes {dimension_semantics = [#tpu.dimension_semantics<parallel>], iteration_bounds = array<i64: 2>, scalar_prefetch = 0 : i64, scratch_operands = 0 : i64, tpu.core_type = #tpu.core_type<tc>, window_params = [{transform_indices = @transform_0, window_bounds = array<i64: 8, 192>}, {transform_indices = @transform_1, window_bounds = array<i64: 8, 192>}, {pipeline_mode = #tpu.pipeline_mode<synchronous>, transform_indices = @transform_2, window_bounds = array<i64: 192, 128>}, {pipeline_mode = #tpu.pipeline_mode<synchronous>, transform_indices = @transform_3, window_bounds = array<i64: 384, 128>}, {pipeline_mode = #tpu.pipeline_mode<synchronous>, transform_indices = @transform_4, window_bounds = array<i64: 1, 128>}, {pipeline_mode = #tpu.pipeline_mode<synchronous>, transform_indices = @transform_5, window_bounds = array<i64: 1, 128>}, {transform_indices = @transform_6, window_bounds = array<i64: 8, 64>}]} {
    %c0 = arith.constant 0 : index
    %c0_0 = arith.constant 0 : index
    %0 = vector.load %arg5[%c0, %c0_0] : memref<1x128xf32, #tpu.memory_space<vmem>>, vector<1x128xf32>
    %c0_1 = arith.constant 0 : index
    %c0_2 = arith.constant 0 : index
    %1 = vector.load %arg3[%c0_1, %c0_2] : memref<192x128xf32, #tpu.memory_space<vmem>>, vector<192x128xf32>
    %c0_3 = arith.constant 0 : index
    %c0_4 = arith.constant 0 : index
    %2 = vector.load %arg1[%c0_3, %c0_4] : memref<8x192xf32, #tpu.memory_space<vmem>>, vector<8x192xf32>
    %cst = arith.constant dense<0.000000e+00> : vector<8x128xf32>
    %3 = tpu.matmul %2, %1, %cst {dimension_numbers = #tpu.dot_dimension_numbers<[1], [0], [0], [1], [0, 0, 1, 1], [], []>} : vector<8x192xf32>, vector<192x128xf32>, vector<8x128xf32> -> vector<8x128xf32>
    %4 = vector.broadcast %0 : vector<1x128xf32> to vector<8x128xf32>
    %5 = arith.addf %3, %4 : vector<8x128xf32>
    %cst_5 = arith.constant 0.000000e+00 : f32
    %6 = vector.broadcast %cst_5 : f32 to vector<8x128xf32>
    %7 = arith.maximumf %5, %6 : vector<8x128xf32>
    %c0_6 = arith.constant 0 : index
    %c0_7 = arith.constant 0 : index
    %8 = vector.load %arg2[%c0_6, %c0_7] : memref<8x192xf32, #tpu.memory_space<vmem>>, vector<8x192xf32>
    %cst_8 = arith.constant dense<0.000000e+00> : vector<8x128xf32>
    %9 = tpu.matmul %8, %1, %cst_8 {dimension_numbers = #tpu.dot_dimension_numbers<[1], [0], [0], [1], [0, 0, 1, 1], [], []>} : vector<8x192xf32>, vector<192x128xf32>, vector<8x128xf32> -> vector<8x128xf32>
    %10 = vector.broadcast %0 : vector<1x128xf32> to vector<8x128xf32>
    %11 = arith.addf %9, %10 : vector<8x128xf32>
    %cst_9 = arith.constant 0.000000e+00 : f32
    %12 = vector.broadcast %cst_9 : f32 to vector<8x128xf32>
    %13 = arith.maximumf %11, %12 : vector<8x128xf32>
    %14 = tpu.iota {dimensions = array<i32: 0>} : vector<8x128xi32>
    %c8_i32 = arith.constant 8 : i32
    %c0_i32 = arith.constant 0 : i32
    %15 = arith.cmpi eq, %c8_i32, %c0_i32 : i32
    %c1_i32 = arith.constant 1 : i32
    %16 = arith.select %15, %c1_i32, %c8_i32 : i32
    %17 = vector.broadcast %16 : i32 to vector<8x128xi32>
    %18 = arith.remsi %14, %17 : vector<8x128xi32>
    %c0_i32_10 = arith.constant 0 : i32
    %19 = vector.broadcast %c0_i32_10 : i32 to vector<8x128xi32>
    %20 = arith.cmpi ne, %18, %19 : vector<8x128xi32>
    %c0_i32_11 = arith.constant 0 : i32
    %21 = vector.broadcast %c0_i32_11 : i32 to vector<8x128xi32>
    %22 = arith.cmpi slt, %18, %21 : vector<8x128xi32>
    %c0_i32_12 = arith.constant 0 : i32
    %23 = arith.cmpi slt, %16, %c0_i32_12 : i32
    %24 = vector.broadcast %23 : i1 to vector<8x128xi1>
    %25 = vector.broadcast %24 : vector<8x128xi1> to vector<8x128xi1>
    %26 = arith.xori %22, %25 : vector<8x128xi1>
    %27 = arith.andi %26, %20 : vector<8x128xi1>
    %28 = vector.broadcast %16 : i32 to vector<8x128xi32>
    %29 = arith.addi %18, %28 : vector<8x128xi32>
    %30 = arith.select %27, %29, %18 : vector<8x128xi1>, vector<8x128xi32>
    %c0_i32_13 = arith.constant 0 : i32
    %31 = vector.broadcast %c0_i32_13 : i32 to vector<8x128xi32>
    %32 = arith.cmpi eq, %30, %31 : vector<8x128xi32>
    %c1_i32_14 = arith.constant 1 : i32
    %33 = tpu.dynamic_rotate %13 by %c1_i32_14 dim 0 : vector<8x128xf32>, i32 -> vector<8x128xf32>
    %cst_15 = arith.constant 0.000000e+00 : f32
    %34 = vector.broadcast %cst_15 : f32 to vector<8x128xf32>
    %35 = arith.select %32, %34, %33 : vector<8x128xi1>, vector<8x128xf32>
    %c8_i32_16 = arith.constant 8 : i32
    %c0_i32_17 = arith.constant 0 : i32
    %36 = arith.cmpi eq, %c8_i32_16, %c0_i32_17 : i32
    %c1_i32_18 = arith.constant 1 : i32
    %37 = arith.select %36, %c1_i32_18, %c8_i32_16 : i32
    %38 = vector.broadcast %37 : i32 to vector<8x128xi32>
    %39 = arith.remsi %14, %38 : vector<8x128xi32>
    %c0_i32_19 = arith.constant 0 : i32
    %40 = vector.broadcast %c0_i32_19 : i32 to vector<8x128xi32>
    %41 = arith.cmpi ne, %39, %40 : vector<8x128xi32>
    %c0_i32_20 = arith.constant 0 : i32
    %42 = vector.broadcast %c0_i32_20 : i32 to vector<8x128xi32>
    %43 = arith.cmpi slt, %39, %42 : vector<8x128xi32>
    %c0_i32_21 = arith.constant 0 : i32
    %44 = arith.cmpi slt, %37, %c0_i32_21 : i32
    %45 = vector.broadcast %44 : i1 to vector<8x128xi1>
    %46 = vector.broadcast %45 : vector<8x128xi1> to vector<8x128xi1>
    %47 = arith.xori %43, %46 : vector<8x128xi1>
    %48 = arith.andi %47, %41 : vector<8x128xi1>
    %49 = vector.broadcast %37 : i32 to vector<8x128xi32>
    %50 = arith.addi %39, %49 : vector<8x128xi32>
    %51 = arith.select %48, %50, %39 : vector<8x128xi1>, vector<8x128xi32>
    %c7_i32 = arith.constant 7 : i32
    %52 = vector.broadcast %c7_i32 : i32 to vector<8x128xi32>
    %53 = arith.cmpi eq, %51, %52 : vector<8x128xi32>
    %c7_i32_22 = arith.constant 7 : i32
    %54 = tpu.dynamic_rotate %7 by %c7_i32_22 dim 0 : vector<8x128xf32>, i32 -> vector<8x128xf32>
    %cst_23 = arith.constant 0.000000e+00 : f32
    %55 = vector.broadcast %cst_23 : f32 to vector<8x128xf32>
    %56 = arith.select %53, %55, %54 : vector<8x128xi1>, vector<8x128xf32>
    %57 = tpu.concatenate %35, %7, %13 in 1 : vector<8x128xf32>, vector<8x128xf32>, vector<8x128xf32> -> vector<8x384xf32>
    %58 = tpu.concatenate %7, %13, %56 in 1 : vector<8x128xf32>, vector<8x128xf32>, vector<8x128xf32> -> vector<8x384xf32>
    %c0_24 = arith.constant 0 : index
    %c0_25 = arith.constant 0 : index
    %59 = vector.load %arg4[%c0_24, %c0_25] : memref<384x128xf32, #tpu.memory_space<vmem>>, vector<384x128xf32>
    %c0_26 = arith.constant 0 : index
    %c0_27 = arith.constant 0 : index
    %60 = vector.load %arg6[%c0_26, %c0_27] : memref<1x128xf32, #tpu.memory_space<vmem>>, vector<1x128xf32>
    %cst_28 = arith.constant dense<0.000000e+00> : vector<8x128xf32>
    %61 = tpu.matmul %57, %59, %cst_28 {dimension_numbers = #tpu.dot_dimension_numbers<[1], [0], [0], [1], [0, 0, 1, 1], [], []>} : vector<8x384xf32>, vector<384x128xf32>, vector<8x128xf32> -> vector<8x128xf32>
    %62 = vector.broadcast %60 : vector<1x128xf32> to vector<8x128xf32>
    %63 = arith.addf %61, %62 : vector<8x128xf32>
    %cst_29 = arith.constant dense<0.000000e+00> : vector<8x128xf32>
    %64 = tpu.matmul %58, %59, %cst_29 {dimension_numbers = #tpu.dot_dimension_numbers<[1], [0], [0], [1], [0, 0, 1, 1], [], []>} : vector<8x384xf32>, vector<384x128xf32>, vector<8x128xf32> -> vector<8x128xf32>
    %65 = vector.broadcast %60 : vector<1x128xf32> to vector<8x128xf32>
    %66 = arith.addf %64, %65 : vector<8x128xf32>
    %67 = arith.maximumf %63, %66 : vector<8x128xf32>
    %68 = vector.extract_strided_slice %67 {offsets = [0, 0], sizes = [8, 64], strides = [1, 1]} : vector<8x128xf32> to vector<8x64xf32>
    %69 = vector.extract_strided_slice %67 {offsets = [0, 64], sizes = [8, 64], strides = [1, 1]} : vector<8x128xf32> to vector<8x64xf32>
    %70 = arith.maximumf %68, %69 : vector<8x64xf32>
    %cst_30 = arith.constant 0.000000e+00 : f32
    %71 = vector.broadcast %cst_30 : f32 to vector<8x64xf32>
    %72 = arith.maximumf %70, %71 : vector<8x64xf32>
    %c0_31 = arith.constant 0 : index
    %c0_32 = arith.constant 0 : index
    %73 = vector.load %arg7[%c0_31, %c0_32] : memref<8x64xf32, #tpu.memory_space<vmem>>, vector<8x64xf32>
    tpu.vector_store %arg7[%c0_31, %c0_32], %72 {strides = array<i32>} : memref<8x64xf32, #tpu.memory_space<vmem>>, vector<8x64xf32>,
    return
  }
  func.func @transform_0(%arg0: i32) -> (i32, i32) {
    %c0_i32 = arith.constant 0 : i32
    %c0_i32_0 = arith.constant 0 : i32
    return %arg0, %c0_i32 : i32, i32
  }
  func.func @transform_1(%arg0: i32) -> (i32, i32) {
    %c0_i32 = arith.constant 0 : i32
    %c0_i32_0 = arith.constant 0 : i32
    return %arg0, %c0_i32 : i32, i32
  }
  func.func @transform_2(%arg0: i32) -> (i32, i32) {
    %c0_i32 = arith.constant 0 : i32
    %c0_i32_0 = arith.constant 0 : i32
    %c0_i32_1 = arith.constant 0 : i32
    return %c0_i32, %c0_i32_0 : i32, i32
  }
  func.func @transform_3(%arg0: i32) -> (i32, i32) {
    %c0_i32 = arith.constant 0 : i32
    %c0_i32_0 = arith.constant 0 : i32
    %c0_i32_1 = arith.constant 0 : i32
    return %c0_i32, %c0_i32_0 : i32, i32
  }
  func.func @transform_4(%arg0: i32) -> (i32, i32) {
    %c0_i32 = arith.constant 0 : i32
    %c0_i32_0 = arith.constant 0 : i32
    %c0_i32_1 = arith.constant 0 : i32
    return %c0_i32, %c0_i32_0 : i32, i32
  }
  func.func @transform_5(%arg0: i32) -> (i32, i32) {
    %c0_i32 = arith.constant 0 : i32
    %c0_i32_0 = arith.constant 0 : i32
    %c0_i32_1 = arith.constant 0 : i32
    return %c0_i32, %c0_i32_0 : i32, i32
  }
  func.func @transform_6(%arg0: i32) -> (i32, i32) {
    %c0_i32 = arith.constant 0 : i32
    %c0_i32_0 = arith.constant 0 : i32
    return %arg0, %c0_i32 : i32, i32
  }
}

</mosaic_0001>

<llo_original>
// kernel: a_call__.1
$region0: #{a_call__.1}
  #allocation0 [shape = 'u32[]', space=smem, size = 0x4, offset = 0x4, fixed_abs, tag = 'smem constant byte address 0x4 - core index']
  #allocation1 [shape = 'u32[144,128]{1,0:T(1,128)}', space=vmem, size = 0x12000, scoped, tag = 'internal scratch']
  %s0 = inlined_call_operand.vmem [shape: f32[16,192], index: 0, kind: input, shape index: {}]
  %s1 = inlined_call_operand.vmem [shape: f32[16,192], index: 1, kind: input, shape index: {}]
  %s2 = inlined_call_operand.vmem [shape: f32[192,128], index: 2, kind: input, shape index: {}]
  %s3 = inlined_call_operand.vmem [shape: f32[384,128], index: 3, kind: input, shape index: {}]
  %s4 = inlined_call_operand.vmem [shape: f32[1,128], index: 4, kind: input, shape index: {}]
  %s5 = inlined_call_operand.vmem [shape: f32[1,128], index: 5, kind: input, shape index: {}]
  %s6 = inlined_call_operand.vmem [shape: f32[16,64], index: 6, kind: output, shape index: {}]
  %s7 = sld [smem:[#allocation0]]
  $region57: #{a_call__.1} parent=0
    _
  %s9 = ssub.s32 1, %s7
  %s10 = scalar_select 0, %s9, %s7
  loop: start=0, step=1, limit=4
  $region2: #{a_call__.1} parent=0 // loop_pre_header
    _
  $region3: #{a_call__.1} parent=0 // loop_header
    %s12 = sphi 0, %s16
    %p13 = scmp.ge.s32.totalorder %s12, 4
    %s22 = sphi 0, %s24
    %s25 = sphi 0, %s22
    %s26 = sphi 0, %s25
    %s42 = sphi 0, %s26
    %s48 = sphi 0, %s50
    %s51 = sphi 0, %s48
    %s52 = sphi 0, %s51
    %s68 = sphi 0, %s52
    %s72 = sphi 0, %s72
    %s74 = sphi 0, %s72
    %s75 = sphi 0, %s74
    %s89 = sphi 0, %s75
    %s93 = sphi 0, %s93
    %s95 = sphi 0, %s93
    %s96 = sphi 0, %s95
    %s110 = sphi 0, %s96
    %s114 = sphi 0, %s114
    %s116 = sphi 0, %s114
    %s117 = sphi 0, %s116
    %s131 = sphi 0, %s117
    %s135 = sphi 0, %s135
    %s137 = sphi 0, %s135
    %s138 = sphi 0, %s137
    %s152 = sphi 0, %s138
    %s158 = sphi 0, %s160
    %s161 = sphi 0, %s158
    %s162 = sphi 0, %s161
    %s178 = sphi 0, %s162
  $region4: #{a_call__.1} parent=0 // loop_header_branch
    %15 = sbr.rel (%p13) target = $region8
  $region5: #{a_call__.1} parent=0 // loop_body
    %s17 = ssub.s32 %s12, 1
    %s18 = ssub.s32 %s12, 2
    %s19 = sadd.s32 %s12, 1
    %s20 = ssub.s32 %s12, %s19
    %p21 = scmp.eq.s32.totalorder %s20, 0
    %s23 = sadd.s32 %s22, 1
    %s24 = scalar_select %p21, %s22, %s23
    %p27 = pneg %p21
    %p28 = scmp.eq.s32.totalorder %s12, 1
    %p29 = por %p27, %p28
    %p30 = scmp.ne.s32.totalorder %s22, %s25
    %p31 = scmp.eq.s32.totalorder %s12, 0
    %p32 = por %p30, %p31
    %p33 = scmp.ne.s32.totalorder %s22, %s25
    %p34 = scmp.eq.s32.totalorder %s17, 1
    %p35 = por %p33, %p34
    %p36 = scmp.ne.s32.totalorder %s25, %s26
    %p37 = scmp.eq.s32.totalorder %s17, 0
    %p38 = por %p36, %p37
    %p39 = scmp.ne.s32.totalorder %s25, %s26
    %p40 = scmp.eq.s32.totalorder %s18, 1
    %p41 = por %p39, %p40
    %p43 = scmp.ne.s32.totalorder %s26, %s42
    %p44 = scmp.eq.s32.totalorder %s18, 0
    %p45 = por %p43, %p44
    %s46 = ssub.s32 %s12, %s19
    %p47 = scmp.eq.s32.totalorder %s46, 0
    %s49 = sadd.s32 %s48, 1
    %s50 = scalar_select %p47, %s48, %s49
    %p53 = pneg %p47
    %p54 = scmp.eq.s32.totalorder %s12, 1
    %p55 = por %p53, %p54
    %p56 = scmp.ne.s32.totalorder %s48, %s51
    %p57 = scmp.eq.s32.totalorder %s12, 0
    %p58 = por %p56, %p57
    %p59 = scmp.ne.s32.totalorder %s48, %s51
    %p60 = scmp.eq.s32.totalorder %s17, 1
    %p61 = por %p59, %p60
    %p62 = scmp.ne.s32.totalorder %s51, %s52
    %p63 = scmp.eq.s32.totalorder %s17, 0
    %p64 = por %p62, %p63
    %p65 = scmp.ne.s32.totalorder %s51, %s52
    %p66 = scmp.eq.s32.totalorder %s18, 1
    %p67 = por %p65, %p66
    %p69 = scmp.ne.s32.totalorder %s52, %s68
    %p70 = scmp.eq.s32.totalorder %s18, 0
    %p71 = por %p69, %p70
    %s73 = sadd.s32 %s72, 1
    %p76 = scmp.eq.s32.totalorder %s12, 1
    %p77 = scmp.ne.s32.totalorder %s72, %s74
    %p78 = scmp.eq.s32.totalorder %s12, 0
    %p79 = por %p77, %p78
    %p80 = scmp.ne.s32.totalorder %s72, %s74
    %p81 = scmp.eq.s32.totalorder %s17, 1
    %p82 = por %p80, %p81
    %p83 = scmp.ne.s32.totalorder %s74, %s75
    %p84 = scmp.eq.s32.totalorder %s17, 0
    %p85 = por %p83, %p84
    %p86 = scmp.ne.s32.totalorder %s74, %s75
    %p87 = scmp.eq.s32.totalorder %s18, 1
    %p88 = por %p86, %p87
    %p90 = scmp.ne.s32.totalorder %s75, %s89
    %p91 = scmp.eq.s32.totalorder %s18, 0
    %p92 = por %p90, %p91
    %s94 = sadd.s32 %s93, 1
    %p97 = scmp.eq.s32.totalorder %s12, 1
    %p98 = scmp.ne.s32.totalorder %s93, %s95
    %p99 = scmp.eq.s32.totalorder %s12, 0
    %p100 = por %p98, %p99
    %p101 = scmp.ne.s32.totalorder %s93, %s95
    %p102 = scmp.eq.s32.totalorder %s17, 1
    %p103 = por %p101, %p102
    %p104 = scmp.ne.s32.totalorder %s95, %s96
    %p105 = scmp.eq.s32.totalorder %s17, 0
    %p106 = por %p104, %p105
    %p107 = scmp.ne.s32.totalorder %s95, %s96
    %p108 = scmp.eq.s32.totalorder %s18, 1
    %p109 = por %p107, %p108
    %p111 = scmp.ne.s32.totalorder %s96, %s110
    %p112 = scmp.eq.s32.totalorder %s18, 0
    %p113 = por %p111, %p112
    %s115 = sadd.s32 %s114, 1
    %p118 = scmp.eq.s32.totalorder %s12, 1
    %p119 = scmp.ne.s32.totalorder %s114, %s116
    %p120 = scmp.eq.s32.totalorder %s12, 0
    %p121 = por %p119, %p120
    %p122 = scmp.ne.s32.totalorder %s114, %s116
    %p123 = scmp.eq.s32.totalorder %s17, 1
    %p124 = por %p122, %p123
    %p125 = scmp.ne.s32.totalorder %s116, %s117
    %p126 = scmp.eq.s32.totalorder %s17, 0
    %p127 = por %p125, %p126
    %p128 = scmp.ne.s32.totalorder %s116, %s117
    %p129 = scmp.eq.s32.totalorder %s18, 1
    %p130 = por %p128, %p129
    %p132 = scmp.ne.s32.totalorder %s117, %s131
    %p133 = scmp.eq.s32.totalorder %s18, 0
    %p134 = por %p132, %p133
    %s136 = sadd.s32 %s135, 1
    %p139 = scmp.eq.s32.totalorder %s12, 1
    %p140 = scmp.ne.s32.totalorder %s135, %s137
    %p141 = scmp.eq.s32.totalorder %s12, 0
    %p142 = por %p140, %p141
    %p143 = scmp.ne.s32.totalorder %s135, %s137
    %p144 = scmp.eq.s32.totalorder %s17, 1
    %p145 = por %p143, %p144
    %p146 = scmp.ne.s32.totalorder %s137, %s138
    %p147 = scmp.eq.s32.totalorder %s17, 0
    %p148 = por %p146, %p147
    %p149 = scmp.ne.s32.totalorder %s137, %s138
    %p150 = scmp.eq.s32.totalorder %s18, 1
    %p151 = por %p149, %p150
    %p153 = scmp.ne.s32.totalorder %s138, %s152
    %p154 = scmp.eq.s32.totalorder %s18, 0
    %p155 = por %p153, %p154
    %s156 = ssub.s32 %s12, %s19
    %p157 = scmp.eq.s32.totalorder %s156, 0
    %s159 = sadd.s32 %s158, 1
    %s160 = scalar_select %p157, %s158, %s159
    %p163 = pneg %p157
    %p164 = scmp.eq.s32.totalorder %s12, 1
    %p165 = por %p163, %p164
    %p166 = scmp.ne.s32.totalorder %s158, %s161
    %p167 = scmp.eq.s32.totalorder %s12, 0
    %p168 = por %p166, %p167
    %p169 = scmp.ne.s32.totalorder %s158, %s161
    %p170 = scmp.eq.s32.totalorder %s17, 1
    %p171 = por %p169, %p170
    %p172 = scmp.ne.s32.totalorder %s161, %s162
    %p173 = scmp.eq.s32.totalorder %s17, 0
    %p174 = por %p172, %p173
    %p175 = scmp.ne.s32.totalorder %s161, %s162
    %p176 = scmp.eq.s32.totalorder %s18, 1
    %p177 = por %p175, %p176
    %p179 = scmp.ne.s32.totalorder %s162, %s178
    %p180 = scmp.eq.s32.totalorder %s18, 0
    %p181 = por %p179, %p180
    %p182 = scmp.le.s32.totalorder 1, %s12
    %p183 = scmp.lt.s32.totalorder %s12, 3
    %p184 = pnand %p182, %p183
    %p185 = pneg %p184
    // Predicated region
    $region9: #{a_call__.1} parent=5 // pred_check
      _
    $region10: #{a_call__.1} parent=5 // pred_check_branch
      %187 = sbr.rel (%p184) target = $region12
    $region11: #{a_call__.1} parent=5 // pred_region
      %s188 = ssub.s32 %s12, 1
      // Predicated region
      $region13: #{a_call__.1} parent=11 // pred_check
        %p189 = pneg %p85
      $region14: #{a_call__.1} parent=11 // pred_check_branch
        %191 = sbr.rel (%p189) target = $region16
      $region15: #{a_call__.1} parent=11 // pred_region
        _
      $region16: #{a_call__.1} parent=11 // pred_fallthru
        _
      // Predicated region
      $region17: #{a_call__.1} parent=11 // pred_check
        %p192 = pneg %p106
      $region18: #{a_call__.1} parent=11 // pred_check_branch
        %194 = sbr.rel (%p192) target = $region20
      $region19: #{a_call__.1} parent=11 // pred_region
        _
      $region20: #{a_call__.1} parent=11 // pred_fallthru
        _
      // Predicated region
      $region21: #{a_call__.1} parent=11 // pred_check
        %p195 = pneg %p127
      $region22: #{a_call__.1} parent=11 // pred_check_branch
        %197 = sbr.rel (%p195) target = $region24
      $region23: #{a_call__.1} parent=11 // pred_region
        _
      $region24: #{a_call__.1} parent=11 // pred_fallthru
        _
      // Predicated region
      $region25: #{a_call__.1} parent=11 // pred_check
        %p198 = pneg %p148
      $region26: #{a_call__.1} parent=11 // pred_check_branch
        %200 = sbr.rel (%p198) target = $region28
      $region27: #{a_call__.1} parent=11 // pred_region
        _
      $region28: #{a_call__.1} parent=11 // pred_fallthru
        _
    $region12: #{a_call__.1} parent=5 // pred_fallthru
      _
    %p201 = scmp.lt.s32.totalorder %s12, 2
    // Predicated region
    $region29: #{a_call__.1} parent=5 // pred_check
      %p202 = pneg %p201
    $region30: #{a_call__.1} parent=5 // pred_check_branch
      %204 = sbr.rel (%p202) target = $region32
    $region31: #{a_call__.1} parent=5 // pred_region
      // Predicated region
      $region33: #{a_call__.1} parent=31 // pred_check
        %p205 = pneg %p32
      $region34: #{a_call__.1} parent=31 // pred_check_branch
        %207 = sbr.rel (%p205) target = $region36
      $region35: #{a_call__.1} parent=31 // pred_region
        %p208 = scmp.lt.s32.totalorder %s12, 1
        %s209 = scalar_select %p208, %s12, 1
        %s210 = smul.addr %s209, 2
        %s211 = smul.addr %s210, 8
        %s212 = scalar_lea.vmem %s0, %s211
      $region36: #{a_call__.1} parent=31 // pred_fallthru
        _
      // Predicated region
      $region37: #{a_call__.1} parent=31 // pred_check
        %p213 = pneg %p58
      $region38: #{a_call__.1} parent=31 // pred_check_branch
        %215 = sbr.rel (%p213) target = $region40
      $region39: #{a_call__.1} parent=31 // pred_region
        %p216 = scmp.lt.s32.totalorder %s12, 1
        %s217 = scalar_select %p216, %s12, 1
        %s218 = smul.addr %s217, 2
        %s219 = smul.addr %s218, 8
        %s220 = scalar_lea.vmem %s1, %s219
      $region40: #{a_call__.1} parent=31 // pred_fallthru
        _
    $region32: #{a_call__.1} parent=5 // pred_fallthru
      _
    %p221 = scmp.le.s32.totalorder 1, %s12
    %p222 = scmp.lt.s32.totalorder %s12, 3
    %p223 = pnand %p221, %p222
    %p224 = pneg %p223
    // Predicated region
    $region41: #{a_call__.1} parent=5 // pred_check
      _
    $region42: #{a_call__.1} parent=5 // pred_check_branch
      %226 = sbr.rel (%p223) target = $region44
    $region43: #{a_call__.1} parent=5 // pred_region
      %s227 = ssub.s32 %s12, 1
      %p228 = scmp.lt.s32.totalorder %s17, 1
      %s229 = scalar_select %p228, %s17, 1
      %s230 = smul.addr %s229, 2
      %s231 = smul.addr %s230, 8
      %s232 = scalar_lea.vmem %s0, %s231
      %p233 = pneg %p38
      %p234 = pneg %p35
      %p235 = scmp.lt.s32.totalorder %s17, 1
      %s236 = scalar_select %p235, %s17, 1
      %s237 = smul.addr %s236, 2
      %s238 = smul.addr %s237, 8
      %s239 = scalar_lea.vmem %s1, %s238
      %p240 = pneg %p64
      %p241 = pneg %p61
      %p242 = pneg %p85
      %p243 = pneg %p82
      %p244 = pneg %p106
      %p245 = pneg %p103
      %p246 = pneg %p127
      %p247 = pneg %p124
      %p248 = pneg %p148
      %p249 = pneg %p145
      %p250 = pneg %p174
      %p251 = pneg %p171
      %p252 = scmp.lt.s32.totalorder %s17, 1
      %s253 = scalar_select %p252, %s17, 1
      %s254 = smul.addr %s253, 8
      %s255 = scalar_lea.vmem %s6, %s254
      %p256 = scmp.lt.s32.totalorder %s17, 1
      %s257 = scalar_select %p256, %s17, 1
      %s258 = smul.addr %s257, 2
      %s259 = smul.addr %s258, 8
      %s260 = scalar_lea.vmem %s0, %s259
      %p261 = scmp.lt.s32.totalorder %s17, 1
      %s262 = scalar_select %p261, %s17, 1
      %s263 = smul.addr %s262, 2
      %s264 = smul.addr %s263, 8
      %s265 = scalar_lea.vmem %s1, %s264
      %p266 = scmp.lt.s32.totalorder %s17, 1
      %s267 = scalar_select %p266, %s17, 1
      %s268 = smul.addr %s267, 8
      %s269 = scalar_lea.vmem %s6, %s268
      %v270 = vld [vmem:[%s4] sm:$0x1]
      %v271 = vld [vmem:[%s2] sm:$0xff]
      %v272 = vld [vmem:[%s2 + $0x8] sm:$0xff]
      %v273 = vld [vmem:[%s2 + $0x10] sm:$0xff]
      %v274 = vld [vmem:[%s2 + $0x18] sm:$0xff]
      %v275 = vld [vmem:[%s2 + $0x20] sm:$0xff]
      %v276 = vld [vmem:[%s2 + $0x28] sm:$0xff]
      %v277 = vld [vmem:[%s2 + $0x30] sm:$0xff]
      %v278 = vld [vmem:[%s2 + $0x38] sm:$0xff]
      %v279 = vld [vmem:[%s2 + $0x40] sm:$0xff]
      %v280 = vld [vmem:[%s2 + $0x48] sm:$0xff]
      %v281 = vld [vmem:[%s2 + $0x50] sm:$0xff]
      %v282 = vld [vmem:[%s2 + $0x58] sm:$0xff]
      %v283 = vld [vmem:[%s2 + $0x60] sm:$0xff]
      %v284 = vld [vmem:[%s2 + $0x68] sm:$0xff]
      %v285 = vld [vmem:[%s2 + $0x70] sm:$0xff]
      %v286 = vld [vmem:[%s2 + $0x78] sm:$0xff]
      %v287 = vld [vmem:[%s2 + $0x80] sm:$0xff]
      %v288 = vld [vmem:[%s2 + $0x88] sm:$0xff]
      %v289 = vld [vmem:[%s2 + $0x90] sm:$0xff]
      %v290 = vld [vmem:[%s2 + $0x98] sm:$0xff]
      %v291 = vld [vmem:[%s2 + $0xa0] sm:$0xff]
      %v292 = vld [vmem:[%s2 + $0xa8] sm:$0xff]
      %v293 = vld [vmem:[%s2 + $0xb0] sm:$0xff]
      %v294 = vld [vmem:[%s2 + $0xb8] sm:$0xff]
      %v295 = vld [vmem:[%s260] sm:$0xff]
      %v296 = vld [vmem:[%s260 + $0x8] sm:$0xff]
      %v298 = vlaneseq
      %v299 = vshrl.u32 %v298, 7
      %v300 = vsub.s32 0, %v299
      %v301 = vrot.slane %v270, %v300
      %vm303 = vcmask 523264
      %v305 = vsel %vm303, %v296, 0
      %307 = vmatprep.subr.mxu0 0.0
      %308 = vmatpush1.msra.mxu0 %v271
      %309 = vmatprep.subr.mxu0 0.0
      %310 = vmatpush1.msra.mxu0 %v272
      %311 = vmatprep.subr.mxu0 0.0
      %312 = vmatpush1.msra.mxu0 %v273
      %313 = vmatprep.subr.mxu0 0.0
      %314 = vmatpush1.msra.mxu0 %v274
      %315 = vmatprep.subr.mxu0 0.0
      %316 = vmatpush1.msra.mxu0 %v275
      %317 = vmatprep.subr.mxu0 0.0
      %318 = vmatpush1.msra.mxu0 %v276
      %319 = vmatprep.subr.mxu0 0.0
      %320 = vmatpush1.msra.mxu0 %v277
      %321 = vmatprep.subr.mxu0 0.0
      %322 = vmatpush1.msra.mxu0 %v278
      %323 = vmatprep.subr.mxu0 0.0
      %324 = vmatpush1.msra.mxu0 %v279
      %325 = vmatprep.subr.mxu0 0.0
      %326 = vmatpush1.msra.mxu0 %v280
      %327 = vmatprep.subr.mxu0 0.0
      %328 = vmatpush1.msra.mxu0 %v281
      %329 = vmatprep.subr.mxu0 0.0
      %330 = vmatpush1.msra.mxu0 %v282
      %331 = vmatprep.subr.mxu0 0.0
      %332 = vmatpush1.msra.mxu0 %v283
      %333 = vmatprep.subr.mxu0 0.0
      %334 = vmatpush1.msra.mxu0 %v284
      %335 = vmatprep.subr.mxu0 0.0
      %336 = vmatpush1.msra.mxu0 %v285
      %337 = vmatprep.subr.mxu0 0.0
      %338 = vmatpush1.msra.mxu0 %v286
      %339 = vmatprep.subr.mxu0 0.0
      %340 = vmatpush1.msra.mxu0 %v287
      %341 = vmatprep.subr.mxu0 0.0
      %342 = vmatpush1.msra.mxu0 %v288
      %343 = vmatprep.subr.mxu0 0.0
      %344 = vmatpush1.msra.mxu0 %v289
      %345 = vmatprep.subr.mxu0 0.0
      %346 = vmatpush1.msra.mxu0 %v290
      %347 = vmatprep.subr.mxu0 0.0
      %348 = vmatpush1.msra.mxu0 %v291
      %349 = vmatprep.subr.mxu0 0.0
      %350 = vmatpush1.msra.mxu0 %v292
      %351 = vmatprep.subr.mxu0 0.0
      %352 = vmatpush1.msra.mxu0 %v293
      %353 = vmatprep.subr.mxu0 0.0
      %354 = vmatpush1.msra.mxu0 %v294
      %355 = vmatprep.subr.mxu0 0.0
      %356 = vmatpush1.msra.mxu0 0.0
      %357 = vmatprep.subr.mxu0 0.0
      %358 = vmatpush1.msra.mxu0 0.0
      %359 = vmatprep.subr.mxu0 0.0
      %360 = vmatpush1.msra.mxu0 0.0
      %361 = vmatprep.subr.mxu0 0.0
      %362 = vmatpush1.msra.mxu0 0.0
      %363 = vmatprep.subr.mxu0 0.0
      %364 = vmatpush1.msra.mxu0 0.0
      %365 = vmatprep.subr.mxu0 0.0
      %366 = vmatpush1.msra.mxu0 0.0
      %367 = vmatprep.subr.mxu0 0.0
      %368 = vmatpush1.msra.mxu0 0.0
      %369 = vmatprep.subr.mxu0 0.0
      %370 = vmatpush1.msra.mxu0 0.0
      %371 = vmatprep.mubr.f32.mxu0 %v305
      %372 = vmatmul.mubr.f32.gmra.mrb[0].mxu0 %v295
      %v373 = vpop.f32.mrb[0].mxu0
      %v374 = vadd.f32 %v301, %v373
      %v375 = vpop.f32.mrb[0].mxu0
      %376 = vdwg.mxu0
      %v377 = vmax.f32 %v374, 0.0
      %v378 = vld [vmem:[%s265] sm:$0xff]
      %v379 = vld [vmem:[%s265 + $0x8] sm:$0xff]
      %v381 = vsel %vm303, %v379, 0
      %383 = vmatprep.subr.mxu0 0.0
      %384 = vmatpush1.msra.mxu0 %v271
      %385 = vmatprep.subr.mxu0 0.0
      %386 = vmatpush1.msra.mxu0 %v272
      %387 = vmatprep.subr.mxu0 0.0
      %388 = vmatpush1.msra.mxu0 %v273
      %389 = vmatprep.subr.mxu0 0.0
      %390 = vmatpush1.msra.mxu0 %v274
      %391 = vmatprep.subr.mxu0 0.0
      %392 = vmatpush1.msra.mxu0 %v275
      %393 = vmatprep.subr.mxu0 0.0
      %394 = vmatpush1.msra.mxu0 %v276
      %395 = vmatprep.subr.mxu0 0.0
      %396 = vmatpush1.msra.mxu0 %v277
      %397 = vmatprep.subr.mxu0 0.0
      %398 = vmatpush1.msra.mxu0 %v278
      %399 = vmatprep.subr.mxu0 0.0
      %400 = vmatpush1.msra.mxu0 %v279
      %401 = vmatprep.subr.mxu0 0.0
      %402 = vmatpush1.msra.mxu0 %v280
      %403 = vmatprep.subr.mxu0 0.0
      %404 = vmatpush1.msra.mxu0 %v281
      %405 = vmatprep.subr.mxu0 0.0
      %406 = vmatpush1.msra.mxu0 %v282
      %407 = vmatprep.subr.mxu0 0.0
      %408 = vmatpush1.msra.mxu0 %v283
      %409 = vmatprep.subr.mxu0 0.0
      %410 = vmatpush1.msra.mxu0 %v284
      %411 = vmatprep.subr.mxu0 0.0
      %412 = vmatpush1.msra.mxu0 %v285
      %413 = vmatprep.subr.mxu0 0.0
      %414 = vmatpush1.msra.mxu0 %v286
      %415 = vmatprep.subr.mxu0 0.0
      %416 = vmatpush1.msra.mxu0 %v287
      %417 = vmatprep.subr.mxu0 0.0
      %418 = vmatpush1.msra.mxu0 %v288
      %419 = vmatprep.subr.mxu0 0.0
      %420 = vmatpush1.msra.mxu0 %v289
      %421 = vmatprep.subr.mxu0 0.0
      %422 = vmatpush1.msra.mxu0 %v290
      %423 = vmatprep.subr.mxu0 0.0
      %424 = vmatpush1.msra.mxu0 %v291
      %425 = vmatprep.subr.mxu0 0.0
      %426 = vmatpush1.msra.mxu0 %v292
      %427 = vmatprep.subr.mxu0 0.0
      %428 = vmatpush1.msra.mxu0 %v293
      %429 = vmatprep.subr.mxu0 0.0
      %430 = vmatpush1.msra.mxu0 %v294
      %431 = vmatprep.subr.mxu0 0.0
      %432 = vmatpush1.msra.mxu0 0.0
      %433 = vmatprep.subr.mxu0 0.0
      %434 = vmatpush1.msra.mxu0 0.0
      %435 = vmatprep.subr.mxu0 0.0
      %436 = vmatpush1.msra.mxu0 0.0
      %437 = vmatprep.subr.mxu0 0.0
      %438 = vmatpush1.msra.mxu0 0.0
      %439 = vmatprep.subr.mxu0 0.0
      %440 = vmatpush1.msra.mxu0 0.0
      %441 = vmatprep.subr.mxu0 0.0
      %442 = vmatpush1.msra.mxu0 0.0
      %443 = vmatprep.subr.mxu0 0.0
      %444 = vmatpush1.msra.mxu0 0.0
      %445 = vmatprep.subr.mxu0 0.0
      %446 = vmatpush1.msra.mxu0 0.0
      %447 = vmatprep.mubr.f32.mxu0 %v381
      %448 = vmatmul.mubr.f32.gmra.mrb[0].mxu0 %v378
      %v449 = vpop.f32.mrb[0].mxu0
      %v450 = vadd.f32 %v301, %v449
      %v451 = vpop.f32.mrb[0].mxu0
      %452 = vdwg.mxu0
      %v453 = vmax.f32 %v450, 0.0
      %v454 = vlaneseq
      %v455 = vshrl.u32 %v454, 7
      %vm456 = vcmp.lt.s32.totalorder %v455, 0
      %v457 = vsub.s32 0, %v455
      %v458 = vsel %vm456, %v457, %v455
      %v459 = vshrl.u32 %v458, 3
      %v460 = vand.u32 %v458, 7
      %v461 = vsub.s32 0, %v460
      %v462 = vsel %vm456, %v461, %v460
      %vm463 = vcmp.ne.s32.totalorder %v462, 0
      %vm464 = vcmp.lt.s32.totalorder %v462, 0
      %vm465 = vmand %vm464, %vm463
      %v466 = vadd.s32 %v462, 8
      %v467 = vsel %vm465, %v466, %v462
      %vm468 = vcmp.eq.s32.totalorder %v467, 0
      %v469 = vrot.slane %v453, 7
      %v470 = vsel %vm468, 0.0, %v469
      %vm471 = vcmp.eq.s32.totalorder %v467, 7
      %v472 = vrot.slane %v377, 1
      %v473 = vsel %vm471, 0.0, %v472
      %v474 = vld [vmem:[%s3] sm:$0xff]
      %v475 = vld [vmem:[%s3 + $0x8] sm:$0xff]
      %v476 = vld [vmem:[%s3 + $0x10] sm:$0xff]
      %v477 = vld [vmem:[%s3 + $0x18] sm:$0xff]
      %v478 = vld [vmem:[%s3 + $0x20] sm:$0xff]
      %v479 = vld [vmem:[%s3 + $0x28] sm:$0xff]
      %v480 = vld [vmem:[%s3 + $0x30] sm:$0xff]
      %v481 = vld [vmem:[%s3 + $0x38] sm:$0xff]
      %v482 = vld [vmem:[%s3 + $0x40] sm:$0xff]
      %v483 = vld [vmem:[%s3 + $0x48] sm:$0xff]
      %v484 = vld [vmem:[%s3 + $0x50] sm:$0xff]
      %v485 = vld [vmem:[%s3 + $0x58] sm:$0xff]
      %v486 = vld [vmem:[%s3 + $0x60] sm:$0xff]
      %v487 = vld [vmem:[%s3 + $0x68] sm:$0xff]
      %v488 = vld [vmem:[%s3 + $0x70] sm:$0xff]
      %v489 = vld [vmem:[%s3 + $0x78] sm:$0xff]
      %v490 = vld [vmem:[%s3 + $0x80] sm:$0xff]
      %v491 = vld [vmem:[%s3 + $0x88] sm:$0xff]
      %v492 = vld [vmem:[%s3 + $0x90] sm:$0xff]
      %v493 = vld [vmem:[%s3 + $0x98] sm:$0xff]
      %v494 = vld [vmem:[%s3 + $0xa0] sm:$0xff]
      %v495 = vld [vmem:[%s3 + $0xa8] sm:$0xff]
      %v496 = vld [vmem:[%s3 + $0xb0] sm:$0xff]
      %v497 = vld [vmem:[%s3 + $0xb8] sm:$0xff]
      %v498 = vld [vmem:[%s3 + $0xc0] sm:$0xff]
      %v499 = vld [vmem:[%s3 + $0xc8] sm:$0xff]
      %v500 = vld [vmem:[%s3 + $0xd0] sm:$0xff]
      %v501 = vld [vmem:[%s3 + $0xd8] sm:$0xff]
      %v502 = vld [vmem:[%s3 + $0xe0] sm:$0xff]
      %v503 = vld [vmem:[%s3 + $0xe8] sm:$0xff]
      %v504 = vld [vmem:[%s3 + $0xf0] sm:$0xff]
      %v505 = vld [vmem:[%s3 + $0xf8] sm:$0xff]
      %v506 = vld [vmem:[%s3 + $0x100] sm:$0xff]
      %v507 = vld [vmem:[%s3 + $0x108] sm:$0xff]
      %v508 = vld [vmem:[%s3 + $0x110] sm:$0xff]
      %v509 = vld [vmem:[%s3 + $0x118] sm:$0xff]
      %v510 = vld [vmem:[%s3 + $0x120] sm:$0xff]
      %v511 = vld [vmem:[%s3 + $0x128] sm:$0xff]
      %v512 = vld [vmem:[%s3 + $0x130] sm:$0xff]
      %v513 = vld [vmem:[%s3 + $0x138] sm:$0xff]
      %v514 = vld [vmem:[%s3 + $0x140] sm:$0xff]
      %v515 = vld [vmem:[%s3 + $0x148] sm:$0xff]
      %v516 = vld [vmem:[%s3 + $0x150] sm:$0xff]
      %v517 = vld [vmem:[%s3 + $0x158] sm:$0xff]
      %v518 = vld [vmem:[%s3 + $0x160] sm:$0xff]
      %v519 = vld [vmem:[%s3 + $0x168] sm:$0xff]
      %v520 = vld [vmem:[%s3 + $0x170] sm:$0xff]
      %v521 = vld [vmem:[%s3 + $0x178] sm:$0xff]
      %v522 = vld [vmem:[%s5] sm:$0x1]
      %v524 = vlaneseq
      %v525 = vshrl.u32 %v524, 7
      %v526 = vsub.s32 0, %v525
      %v527 = vrot.slane %v522, %v526
      %529 = vmatprep.subr.mxu0 0.0
      %530 = vmatpush1.msra.mxu0 %v474
      %531 = vmatprep.subr.mxu0 0.0
      %532 = vmatpush1.msra.mxu0 %v475
      %533 = vmatprep.subr.mxu0 0.0
      %534 = vmatpush1.msra.mxu0 %v476
      %535 = vmatprep.subr.mxu0 0.0
      %536 = vmatpush1.msra.mxu0 %v477
      %537 = vmatprep.subr.mxu0 0.0
      %538 = vmatpush1.msra.mxu0 %v478
      %539 = vmatprep.subr.mxu0 0.0
      %540 = vmatpush1.msra.mxu0 %v479
      %541 = vmatprep.subr.mxu0 0.0
      %542 = vmatpush1.msra.mxu0 %v480
      %543 = vmatprep.subr.mxu0 0.0
      %544 = vmatpush1.msra.mxu0 %v481
      %545 = vmatprep.subr.mxu0 0.0
      %546 = vmatpush1.msra.mxu0 %v482
      %547 = vmatprep.subr.mxu0 0.0
      %548 = vmatpush1.msra.mxu0 %v483
      %549 = vmatprep.subr.mxu0 0.0
      %550 = vmatpush1.msra.mxu0 %v484
      %551 = vmatprep.subr.mxu0 0.0
      %552 = vmatpush1.msra.mxu0 %v485
      %553 = vmatprep.subr.mxu0 0.0
      %554 = vmatpush1.msra.mxu0 %v486
      %555 = vmatprep.subr.mxu0 0.0
      %556 = vmatpush1.msra.mxu0 %v487
      %557 = vmatprep.subr.mxu0 0.0
      %558 = vmatpush1.msra.mxu0 %v488
      %559 = vmatprep.subr.mxu0 0.0
      %560 = vmatpush1.msra.mxu0 %v489
      %561 = vmatprep.subr.mxu0 0.0
      %562 = vmatpush1.msra.mxu0 %v490
      %563 = vmatprep.subr.mxu0 0.0
      %564 = vmatpush1.msra.mxu0 %v491
      %565 = vmatprep.subr.mxu0 0.0
      %566 = vmatpush1.msra.mxu0 %v492
      %567 = vmatprep.subr.mxu0 0.0
      %568 = vmatpush1.msra.mxu0 %v493
      %569 = vmatprep.subr.mxu0 0.0
      %570 = vmatpush1.msra.mxu0 %v494
      %571 = vmatprep.subr.mxu0 0.0
      %572 = vmatpush1.msra.mxu0 %v495
      %573 = vmatprep.subr.mxu0 0.0
      %574 = vmatpush1.msra.mxu0 %v496
      %575 = vmatprep.subr.mxu0 0.0
      %576 = vmatpush1.msra.mxu0 %v497
      %577 = vmatprep.subr.mxu0 0.0
      %578 = vmatpush1.msra.mxu0 %v498
      %579 = vmatprep.subr.mxu0 0.0
      %580 = vmatpush1.msra.mxu0 %v499
      %581 = vmatprep.subr.mxu0 0.0
      %582 = vmatpush1.msra.mxu0 %v500
      %583 = vmatprep.subr.mxu0 0.0
      %584 = vmatpush1.msra.mxu0 %v501
      %585 = vmatprep.subr.mxu0 0.0
      %586 = vmatpush1.msra.mxu0 %v502
      %587 = vmatprep.subr.mxu0 0.0
      %588 = vmatpush1.msra.mxu0 %v503
      %589 = vmatprep.subr.mxu0 0.0
      %590 = vmatpush1.msra.mxu0 %v504
      %591 = vmatprep.subr.mxu0 0.0
      %592 = vmatpush1.msra.mxu0 %v505
      %593 = vmatprep.mubr.f32.mxu0 %v377
      %594 = vmatmul.mubr.f32.gmra.mrb[0].mxu0 %v470
      %v595 = vpop.f32.mrb[0].mxu0
      %v596 = vadd.f32 %v527, %v595
      %v597 = vpop.f32.mrb[0].mxu0
      %598 = vdwg.mxu0
      %599 = vmatprep.subr.mxu0 0.0
      %600 = vmatpush1.msra.mxu0 %v506
      %601 = vmatprep.subr.mxu0 0.0
      %602 = vmatpush1.msra.mxu0 %v507
      %603 = vmatprep.subr.mxu0 0.0
      %604 = vmatpush1.msra.mxu0 %v508
      %605 = vmatprep.subr.mxu0 0.0
      %606 = vmatpush1.msra.mxu0 %v509
      %607 = vmatprep.subr.mxu0 0.0
      %608 = vmatpush1.msra.mxu0 %v510
      %609 = vmatprep.subr.mxu0 0.0
      %610 = vmatpush1.msra.mxu0 %v511
      %611 = vmatprep.subr.mxu0 0.0
      %612 = vmatpush1.msra.mxu0 %v512
      %613 = vmatprep.subr.mxu0 0.0
      %614 = vmatpush1.msra.mxu0 %v513
      %615 = vmatprep.subr.mxu0 0.0
      %616 = vmatpush1.msra.mxu0 %v514
      %617 = vmatprep.subr.mxu0 0.0
      %618 = vmatpush1.msra.mxu0 %v515
      %619 = vmatprep.subr.mxu0 0.0
      %620 = vmatpush1.msra.mxu0 %v516
      %621 = vmatprep.subr.mxu0 0.0
      %622 = vmatpush1.msra.mxu0 %v517
      %623 = vmatprep.subr.mxu0 0.0
      %624 = vmatpush1.msra.mxu0 %v518
      %625 = vmatprep.subr.mxu0 0.0
      %626 = vmatpush1.msra.mxu0 %v519
      %627 = vmatprep.subr.mxu0 0.0
      %628 = vmatpush1.msra.mxu0 %v520
      %629 = vmatprep.subr.mxu0 0.0
      %630 = vmatpush1.msra.mxu0 %v521
      %631 = vmatprep.subr.mxu0 0.0
      %632 = vmatpush1.msra.mxu0 0.0
      %633 = vmatprep.subr.mxu0 0.0
      %634 = vmatpush1.msra.mxu0 0.0
      %635 = vmatprep.subr.mxu0 0.0
      %636 = vmatpush1.msra.mxu0 0.0
      %637 = vmatprep.subr.mxu0 0.0
      %638 = vmatpush1.msra.mxu0 0.0
      %639 = vmatprep.subr.mxu0 0.0
      %640 = vmatpush1.msra.mxu0 0.0
      %641 = vmatprep.subr.mxu0 0.0
      %642 = vmatpush1.msra.mxu0 0.0
      %643 = vmatprep.subr.mxu0 0.0
      %644 = vmatpush1.msra.mxu0 0.0
      %645 = vmatprep.subr.mxu0 0.0
      %646 = vmatpush1.msra.mxu0 0.0
      %647 = vmatprep.subr.mxu0 0.0
      %648 = vmatpush1.msra.mxu0 0.0
      %649 = vmatprep.subr.mxu0 0.0
      %650 = vmatpush1.msra.mxu0 0.0
      %651 = vmatprep.subr.mxu0 0.0
      %652 = vmatpush1.msra.mxu0 0.0
      %653 = vmatprep.subr.mxu0 0.0
      %654 = vmatpush1.msra.mxu0 0.0
      %655 = vmatprep.subr.mxu0 0.0
      %656 = vmatpush1.msra.mxu0 0.0
      %657 = vmatprep.subr.mxu0 0.0
      %658 = vmatpush1.msra.mxu0 0.0
      %659 = vmatprep.subr.mxu0 0.0
      %660 = vmatpush1.msra.mxu0 0.0
      %661 = vmatprep.subr.mxu0 0.0
      %662 = vmatpush1.msra.mxu0 0.0
      %663 = vmatprep.mubr.f32.mxu0 0.0
      %664 = vmatmul.mubr.f32.gmra.mrb[0].mxu0 %v453
      %v665 = vpop.f32.mrb[0].mxu0
      %v666 = vadd.f32 %v596, %v665
      %v667 = vpop.f32.mrb[0].mxu0
      %668 = vdwg.mxu0
      %669 = vmatprep.subr.mxu0 0.0
      %670 = vmatpush1.msra.mxu0 %v474
      %671 = vmatprep.subr.mxu0 0.0
      %672 = vmatpush1.msra.mxu0 %v475
      %673 = vmatprep.subr.mxu0 0.0
      %674 = vmatpush1.msra.mxu0 %v476
      %675 = vmatprep.subr.mxu0 0.0
      %676 = vmatpush1.msra.mxu0 %v477
      %677 = vmatprep.subr.mxu0 0.0
      %678 = vmatpush1.msra.mxu0 %v478
      %679 = vmatprep.subr.mxu0 0.0
      %680 = vmatpush1.msra.mxu0 %v479
      %681 = vmatprep.subr.mxu0 0.0
      %682 = vmatpush1.msra.mxu0 %v480
      %683 = vmatprep.subr.mxu0 0.0
      %684 = vmatpush1.msra.mxu0 %v481
      %685 = vmatprep.subr.mxu0 0.0
      %686 = vmatpush1.msra.mxu0 %v482
      %687 = vmatprep.subr.mxu0 0.0
      %688 = vmatpush1.msra.mxu0 %v483
      %689 = vmatprep.subr.mxu0 0.0
      %690 = vmatpush1.msra.mxu0 %v484
      %691 = vmatprep.subr.mxu0 0.0
      %692 = vmatpush1.msra.mxu0 %v485
      %693 = vmatprep.subr.mxu0 0.0
      %694 = vmatpush1.msra.mxu0 %v486
      %695 = vmatprep.subr.mxu0 0.0
      %696 = vmatpush1.msra.mxu0 %v487
      %697 = vmatprep.subr.mxu0 0.0
      %698 = vmatpush1.msra.mxu0 %v488
      %699 = vmatprep.subr.mxu0 0.0
      %700 = vmatpush1.msra.mxu0 %v489
      %701 = vmatprep.subr.mxu0 0.0
      %702 = vmatpush1.msra.mxu0 %v490
      %703 = vmatprep.subr.mxu0 0.0
      %704 = vmatpush1.msra.mxu0 %v491
      %705 = vmatprep.subr.mxu0 0.0
      %706 = vmatpush1.msra.mxu0 %v492
      %707 = vmatprep.subr.mxu0 0.0
      %708 = vmatpush1.msra.mxu0 %v493
      %709 = vmatprep.subr.mxu0 0.0
      %710 = vmatpush1.msra.mxu0 %v494
      %711 = vmatprep.subr.mxu0 0.0
      %712 = vmatpush1.msra.mxu0 %v495
      %713 = vmatprep.subr.mxu0 0.0
      %714 = vmatpush1.msra.mxu0 %v496
      %715 = vmatprep.subr.mxu0 0.0
      %716 = vmatpush1.msra.mxu0 %v497
      %717 = vmatprep.subr.mxu0 0.0
      %718 = vmatpush1.msra.mxu0 %v498
      %719 = vmatprep.subr.mxu0 0.0
      %720 = vmatpush1.msra.mxu0 %v499
      %721 = vmatprep.subr.mxu0 0.0
      %722 = vmatpush1.msra.mxu0 %v500
      %723 = vmatprep.subr.mxu0 0.0
      %724 = vmatpush1.msra.mxu0 %v501
      %725 = vmatprep.subr.mxu0 0.0
      %726 = vmatpush1.msra.mxu0 %v502
      %727 = vmatprep.subr.mxu0 0.0
      %728 = vmatpush1.msra.mxu0 %v503
      %729 = vmatprep.subr.mxu0 0.0
      %730 = vmatpush1.msra.mxu0 %v504
      %731 = vmatprep.subr.mxu0 0.0
      %732 = vmatpush1.msra.mxu0 %v505
      %733 = vmatprep.mubr.f32.mxu0 %v453
      %734 = vmatmul.mubr.f32.gmra.mrb[0].mxu0 %v377
      %v735 = vpop.f32.mrb[0].mxu0
      %v736 = vadd.f32 %v527, %v735
      %v737 = vpop.f32.mrb[0].mxu0
      %738 = vdwg.mxu0
      %739 = vmatprep.subr.mxu0 0.0
      %740 = vmatpush1.msra.mxu0 %v506
      %741 = vmatprep.subr.mxu0 0.0
      %742 = vmatpush1.msra.mxu0 %v507
      %743 = vmatprep.subr.mxu0 0.0
      %744 = vmatpush1.msra.mxu0 %v508
      %745 = vmatprep.subr.mxu0 0.0
      %746 = vmatpush1.msra.mxu0 %v509
      %747 = vmatprep.subr.mxu0 0.0
      %748 = vmatpush1.msra.mxu0 %v510
      %749 = vmatprep.subr.mxu0 0.0
      %750 = vmatpush1.msra.mxu0 %v511
      %751 = vmatprep.subr.mxu0 0.0
      %752 = vmatpush1.msra.mxu0 %v512
      %753 = vmatprep.subr.mxu0 0.0
      %754 = vmatpush1.msra.mxu0 %v513
      %755 = vmatprep.subr.mxu0 0.0
      %756 = vmatpush1.msra.mxu0 %v514
      %757 = vmatprep.subr.mxu0 0.0
      %758 = vmatpush1.msra.mxu0 %v515
      %759 = vmatprep.subr.mxu0 0.0
      %760 = vmatpush1.msra.mxu0 %v516
      %761 = vmatprep.subr.mxu0 0.0
      %762 = vmatpush1.msra.mxu0 %v517
      %763 = vmatprep.subr.mxu0 0.0
      %764 = vmatpush1.msra.mxu0 %v518
      %765 = vmatprep.subr.mxu0 0.0
      %766 = vmatpush1.msra.mxu0 %v519
      %767 = vmatprep.subr.mxu0 0.0
      %768 = vmatpush1.msra.mxu0 %v520
      %769 = vmatprep.subr.mxu0 0.0
      %770 = vmatpush1.msra.mxu0 %v521
      %771 = vmatprep.subr.mxu0 0.0
      %772 = vmatpush1.msra.mxu0 0.0
      %773 = vmatprep.subr.mxu0 0.0
      %774 = vmatpush1.msra.mxu0 0.0
      %775 = vmatprep.subr.mxu0 0.0
      %776 = vmatpush1.msra.mxu0 0.0
      %777 = vmatprep.subr.mxu0 0.0
      %778 = vmatpush1.msra.mxu0 0.0
      %779 = vmatprep.subr.mxu0 0.0
      %780 = vmatpush1.msra.mxu0 0.0
      %781 = vmatprep.subr.mxu0 0.0
      %782 = vmatpush1.msra.mxu0 0.0
      %783 = vmatprep.subr.mxu0 0.0
      %784 = vmatpush1.msra.mxu0 0.0
      %785 = vmatprep.subr.mxu0 0.0
      %786 = vmatpush1.msra.mxu0 0.0
      %787 = vmatprep.subr.mxu0 0.0
      %788 = vmatpush1.msra.mxu0 0.0
      %789 = vmatprep.subr.mxu0 0.0
      %790 = vmatpush1.msra.mxu0 0.0
      %791 = vmatprep.subr.mxu0 0.0
      %792 = vmatpush1.msra.mxu0 0.0
      %793 = vmatprep.subr.mxu0 0.0
      %794 = vmatpush1.msra.mxu0 0.0
      %795 = vmatprep.subr.mxu0 0.0
      %796 = vmatpush1.msra.mxu0 0.0
      %797 = vmatprep.subr.mxu0 0.0
      %798 = vmatpush1.msra.mxu0 0.0
      %799 = vmatprep.subr.mxu0 0.0
      %800 = vmatpush1.msra.mxu0 0.0
      %801 = vmatprep.subr.mxu0 0.0
      %802 = vmatpush1.msra.mxu0 0.0
      %803 = vmatprep.mubr.f32.mxu0 0.0
      %804 = vmatmul.mubr.f32.gmra.mrb[0].mxu0 %v473
      %v805 = vpop.f32.mrb[0].mxu0
      %v806 = vadd.f32 %v736, %v805
      %v807 = vpop.f32.mrb[0].mxu0
      %808 = vdwg.mxu0
      %v809 = vmax.f32 %v666, %v806
      %811 = vrot.lane.b32.xlu0 %v809, 64
      %v812 = vpop.permute.xlu0 %811
      %v814 = vmax.f32 %v809, %v812
      %v815 = vmax.f32 %v814, 0.0
      %816 = vst.msk [vmem:[%s269] sm:$0xff] %vm303, %v815
      %p817 = scmp.lt.s32.totalorder %s17, 1
      %s818 = scalar_select %p817, %s17, 1
      %s819 = smul.addr %s818, 8
      %s820 = scalar_lea.vmem %s6, %s819
      // Predicated region
      $region45: #{a_call__.1} parent=43 // pred_check
        %p821 = pneg %p171
      $region46: #{a_call__.1} parent=43 // pred_check_branch
        %823 = sbr.rel (%p821) target = $region48
      $region47: #{a_call__.1} parent=43 // pred_region
        _
      $region48: #{a_call__.1} parent=43 // pred_fallthru
        _
    $region44: #{a_call__.1} parent=5 // pred_fallthru
      _
    %p824 = scmp.le.s32.totalorder 2, %s12
    // Predicated region
    $region49: #{a_call__.1} parent=5 // pred_check
      %p825 = pneg %p824
    $region50: #{a_call__.1} parent=5 // pred_check_branch
      %827 = sbr.rel (%p825) target = $region52
    $region51: #{a_call__.1} parent=5 // pred_region
      %s828 = ssub.s32 %s12, 2
      // Predicated region
      $region53: #{a_call__.1} parent=51 // pred_check
        %p829 = pneg %p177
      $region54: #{a_call__.1} parent=51 // pred_check_branch
        %831 = sbr.rel (%p829) target = $region56
      $region55: #{a_call__.1} parent=51 // pred_region
        %p832 = scmp.lt.s32.totalorder %s18, 1
        %s833 = scalar_select %p832, %s18, 1
        %s834 = smul.addr %s833, 8
        %s835 = scalar_lea.vmem %s6, %s834
      $region56: #{a_call__.1} parent=51 // pred_fallthru
        _
    $region52: #{a_call__.1} parent=5 // pred_fallthru
      _
  $region6: #{a_call__.1} parent=0 // loop_footer
    %s16 = sadd.s32 1, %s12
  $region7: #{a_call__.1} parent=0 // loop_footer_branch
    %11 = sbr.rel target = $region3
  $region8: #{a_call__.1} parent=0 // loop_exit
    _

</llo_original>
